<compile_context>
chip_gen: v5e
topology: v5e:2x2
jax: 0.10.0
libtpu: 0.0.40
codegen_flags: <defaults>
</compile_context>

<pallas_src>
import functools
import math

import jax
import jax.numpy as jnp
from jax.experimental import pallas as pl
from jax.experimental.pallas import tpu as pltpu

_INV_SQRT2 = 0.7071067811865476


def _round_up(x: int, m: int) -> int:
    return (x + m - 1) // m * m


def _round_down(x: int, m: int) -> int:
    return (x // m) * m


def _cdiv(a: int, b: int) -> int:
    return -(-a // b)


def _chip_kind() -> str:
    try:
        return jax.devices()[0].device_kind.lower()
    except Exception:
        return ""


def _vmem_capacity_bytes(kind: str) -> int:
    try:
        return int(pltpu.get_tpu_info().vmem_capacity_bytes)
    except Exception:
        return (64 << 20) if "v7" in kind else (128 << 20)


def _choose_hidden_block(in_f, hid_p, out_fp, tm_eff, *, w_itemsize, x_itemsize,
                         out_itemsize, budget_bytes):
    """Largest hidden block (multiple of 128, dividing hid_p) fitting VMEM."""
    u = hid_p // 128
    chosen = 128
    for nk in range(1, u + 1):
        if u % nk:
            continue
        th = hid_p // nk
        nbuf = 1 if nk == 1 else 2           # resident -> single-buffered
        need = (
            nbuf * (in_f * th + th * out_fp) * w_itemsize   # W1 / W2 blocks
            + nbuf * th * 4 + out_fp * 4                    # b1 blocks + b2
            + 2 * tm_eff * in_f * x_itemsize                # x tile (dbl-buf)
            + 2 * tm_eff * out_fp * out_itemsize            # out tile (dbl-buf)
            + tm_eff * out_fp * 4                           # f32 accumulator
            + 2 * tm_eff * th * 4                           # fc1/GELU temps
        )
        if need <= budget_bytes:
            return th
        chosen = th
    return chosen


def _mlp_kernel(x_ref, w1_ref, b1_ref, w2_ref, b2_ref, o_ref, acc_ref, *,
                compute_dtype, ew_dtype, approximate_gelu):
    k = pl.program_id(1)

    @pl.when(k == 0)
    def _init():
        acc_ref[...] = jnp.zeros_like(acc_ref)

    # fc1 on the MXU with f32 accumulation. x is cast to the compute dtype in
    # vregs (avoids a wrapper-side cast and its HBM round trip).
    x = x_ref[...].astype(compute_dtype)
    h = jnp.dot(x, w1_ref[...], preferred_element_type=jnp.float32)

    if approximate_gelu:
        # Bias + tanh-GELU in ew_dtype (bf16 on v6e/v7x). tanh runs on the EUP
        # slot, so the VALU stays free and the kernel remains MXU-bound.
        h = h.astype(ew_dtype) + b1_ref[...].astype(ew_dtype)
        h = jax.nn.gelu(h, approximate=True)
    else:
        # Exact nn.GELU (erf) in f32 — bit-parity path with the PyTorch module.
        h = h + b1_ref[...]
        h = 0.5 * h * (1.0 + jax.lax.erf(h * _INV_SQRT2))

    # dropout (p=0.0) / eval mode -> identity.
    # TODO(synk): training-mode dropout (p_drop > 0) needs pltpu.prng_* masks.

    # fc2 contribution of this hidden block, accumulated in f32.
    acc_ref[...] += jnp.dot(h.astype(compute_dtype), w2_ref[...],
                            preferred_element_type=jnp.float32)

    @pl.when(k == pl.num_programs(1) - 1)
    def _finalize():
        o_ref[...] = (acc_ref[...] + b2_ref[...]).astype(o_ref.dtype)


def prepare_mlp_params(w1, b1, w2, b2, *, compute_dtype=jnp.bfloat16,
                       lane_multiple=None):
    """One-time weight prep (pad hid/out to lane multiples + cast).

    Hoisted out of the per-call path so repeated invocations pay no HBM
    traffic for weight padding/casting.
    """
    kind = _chip_kind()
    if lane_multiple is None:
        # v6e/v7x MXUs are 256-wide; v5e is 4x(128x128).
        lane_multiple = 256 if (("v6" in kind) or ("v7" in kind)) else 128
    in_f, hid = w1.shape
    out_f = int(w2.shape[1])
    hid_p = _round_up(hid, lane_multiple)
    out_fp = _round_up(out_f, lane_multiple)
    cd = jnp.dtype(compute_dtype)
    # Zero-padding is mathematically inert: padded W1 cols / b1 entries give
    # GELU(0)=0, padded W2 rows are zero, padded output cols are sliced off.
    w1p = jnp.pad(w1.astype(cd), ((0, 0), (0, hid_p - hid)))
    b1p = jnp.pad(b1.astype(jnp.float32), (0, hid_p - hid)).reshape(1, hid_p)
    w2p = jnp.pad(w2.astype(cd), ((0, hid_p - hid), (0, out_fp - out_f)))
    b2p = jnp.pad(b2.astype(jnp.float32), (0, out_fp - out_f)).reshape(1, out_fp)
    return (w1p, b1p, w2p, b2p), out_f


@functools.partial(jax.jit,
                   static_argnames=("out_features", "tm", "approximate_gelu"))
def mlp_pallas_prepared(x, w1p, b1p, w2p, b2p, *, out_features, tm=256,
                        approximate_gelu=True):
    """x: (n_samples, n_tokens, in_f); weights pre-padded/cast (y = x @ W + b)."""
    n_samples, n_tokens, in_f = x.shape
    hid_p = w1p.shape[1]
    out_fp = w2p.shape[1]
    M = n_samples * n_tokens
    compute_dtype = jnp.dtype(w1p.dtype)
    out_dtype = x.dtype

    kind = _chip_kind()
    multi_tc = "v7" in kind                         # 2 TensorCores per chip
    bf16_ew = ("v6" in kind) or ("v7" in kind)      # bf16 VPU/EUP available
    vmem_limit = int(_vmem_capacity_bytes(kind) * 7 // 8)   # gen-aware + headroom

    ew_dtype = (compute_dtype
                if (bf16_ew and compute_dtype == jnp.dtype(jnp.bfloat16))
                else jnp.dtype(jnp.float32))

    # Row dim: no wrapper-side padding — Pallas masks the partial last tile.
    x2d = x.reshape(M, in_f)
    pad_m = 8 - M if M < 8 else 0                    # only for tiny M (< 8 rows)
    if pad_m:
        x2d = jnp.pad(x2d, ((0, pad_m), (0, 0)))
    Mp = M + pad_m

    # Row tile: multiple of 8, <= Mp. On v7x keep >= 2 row tiles so the
    # "parallel" axis shards across both TensorCores.
    tm_eff = max(8, min(_round_down(tm, 8), _round_down(Mp, 8)))
    if multi_tc and Mp >= 16:
        tm_eff = min(tm_eff, max(8, _round_down(_cdiv(Mp, 2), 8)))
    n_row = _cdiv(Mp, tm_eff)

    # Hidden-dim blocking: weights stay fully resident (and single-buffered)
    # when they fit the VMEM budget; otherwise iterate hid in chunks with an
    # f32 accumulator. v7x (64 MiB) needs this much earlier than v5e/v6e.
    th = _choose_hidden_block(
        in_f, hid_p, out_fp, tm_eff,
        w_itemsize=compute_dtype.itemsize,
        x_itemsize=jnp.dtype(x.dtype).itemsize,
        out_itemsize=jnp.dtype(out_dtype).itemsize,
        budget_bytes=int(vmem_limit * 0.85))
    n_k = hid_p // th

    kernel = functools.partial(_mlp_kernel,
                               compute_dtype=compute_dtype,
                               ew_dtype=ew_dtype,
                               approximate_gelu=approximate_gelu)

    # Single-buffer the grid-invariant operands (halves their VMEM footprint).
    resident = pl.Buffered(1) if n_k == 1 else None

    cost = pl.CostEstimate(
        flops=2 * M * (in_f * hid_p + hid_p * out_fp),
        transcendentals=M * hid_p,
        bytes_accessed=(x.size * x.dtype.itemsize
                        + w1p.size * w1p.dtype.itemsize
                        + w2p.size * w2p.dtype.itemsize
                        + b1p.size * 4 + b2p.size * 4
                        + M * out_features * jnp.dtype(out_dtype).itemsize))

    out2d = pl.pallas_call(
        kernel,
        out_shape=jax.ShapeDtypeStruct((Mp, out_fp), out_dtype),
        grid_spec=pltpu.PrefetchScalarGridSpec(
            num_scalar_prefetch=0,
            grid=(n_row, n_k),
            in_specs=[
                pl.BlockSpec((tm_eff, in_f), lambda i, k: (i, 0)),      # x tile
                pl.BlockSpec((in_f, th), lambda i, k: (0, k),
                             pipeline_mode=resident),                   # W1
                pl.BlockSpec((1, th), lambda i, k: (0, k),
                             pipeline_mode=resident),                   # b1
                pl.BlockSpec((th, out_fp), lambda i, k: (k, 0),
                             pipeline_mode=resident),                   # W2
                pl.BlockSpec((1, out_fp), lambda i, k: (0, 0),
                             pipeline_mode=pl.Buffered(1)),             # b2
            ],
            out_specs=pl.BlockSpec((tm_eff, out_fp), lambda i, k: (i, 0)),
            scratch_shapes=[pltpu.VMEM((tm_eff, out_fp), jnp.float32)],
        ),
        compiler_params=pltpu.CompilerParams(
            dimension_semantics=("parallel", "arbitrary"),
            vmem_limit_bytes=vmem_limit,
        ),
        cost_estimate=cost,
    )(x2d, w1p, b1p, w2p, b2p)

    if pad_m or out_fp != out_features:
        out2d = out2d[:M, :out_features]
    return out2d.reshape(n_samples, n_tokens, out_features)


def mlp_pallas(x, w1, b1, w2, b2, *, compute_dtype=jnp.bfloat16, tm=256,
               approximate_gelu=True):
    """Convenience wrapper (weight prep + kernel). For inference loops, call
    prepare_mlp_params once and reuse the prepared params."""
    params, out_f = prepare_mlp_params(w1, b1, w2, b2,
                                       compute_dtype=compute_dtype)
    return mlp_pallas_prepared(x, *params, out_features=out_f, tm=tm,
                               approximate_gelu=approximate_gelu)


def mlp_reference(x, w1, b1, w2, b2):
    h = jnp.einsum("bti,ih->bth", x, w1,
                   precision=jax.lax.Precision.HIGHEST) + b1
    h = 0.5 * h * (1.0 + jax.lax.erf(h * _INV_SQRT2))        # exact nn.GELU
    return jnp.einsum("bth,ho->bto", h, w2,
                      precision=jax.lax.Precision.HIGHEST) + b2


def _make_params(key, in_features, hidden_features, out_features):
    k1, k2, k3, k4 = jax.random.split(key, 4)
    lim1 = 1.0 / math.sqrt(in_features)
    w1 = jax.random.uniform(k1, (in_features, hidden_features), jnp.float32,
                            -lim1, lim1)
    b1 = jax.random.uniform(k2, (hidden_features,), jnp.float32, -lim1, lim1)
    lim2 = 1.0 / math.sqrt(hidden_features)
    w2 = jax.random.uniform(k3, (hidden_features, out_features), jnp.float32,
                            -lim2, lim2)
    b2 = jax.random.uniform(k4, (out_features,), jnp.float32, -lim2, lim2)
    return w1, b1, w2, b2


if __name__ == "__main__":
    # Small shapes consistent with the module:
    #   n_samples=2, n_patches+1=8, in_features=32, hidden=64, out_features=32
    n_samples, n_tokens = 2, 8
    in_features, hidden_features, out_features = 32, 64, 32

    key = jax.random.PRNGKey(0)
    kx, kp, kx2 = jax.random.split(key, 3)

    x = jax.random.normal(kx, (n_samples, n_tokens, in_features), jnp.float32)
    w1, b1, w2, b2 = _make_params(kp, in_features, hidden_features, out_features)
    ref = mlp_reference(x, w1, b1, w2, b2)

    # 1) Exact path: f32 operands + erf GELU -> tight tolerance vs reference.
    out_exact = mlp_pallas(x, w1, b1, w2, b2,
                           compute_dtype=jnp.float32, approximate_gelu=False)
    jax.block_until_ready(out_exact)
    assert out_exact.shape == (n_samples, n_tokens, out_features)
    assert jnp.allclose(out_exact, ref, atol=1e-4, rtol=1e-4), "exact mismatch"

    # 2) Fast path: bf16 operands + tanh GELU (default), hoisted weight prep.
    params, out_f = prepare_mlp_params(w1, b1, w2, b2)
    out_fast = mlp_pallas_prepared(x, *params, out_features=out_f)
    jax.block_until_ready(out_fast)
    assert out_fast.shape == (n_samples, n_tokens, out_features)
    assert jnp.allclose(out_fast, ref, atol=3e-2, rtol=3e-2), "bf16 mismatch"

    # 3) Ragged row count (M=18, not a multiple of the row tile) exercises the
    #    masked partial-block path (no wrapper-side M padding).
    xr = jax.random.normal(kx2, (2, 9, in_features), jnp.float32)
    out_r = mlp_pallas(xr, w1, b1, w2, b2,
                       compute_dtype=jnp.float32, approximate_gelu=False)
    jax.block_until_ready(out_r)
    assert out_r.shape == (2, 9, out_features)
    assert jnp.allclose(out_r, mlp_reference(xr, w1, b1, w2, b2),
                        atol=1e-4, rtol=1e-4), "ragged mismatch"

    print("KERNEL_OK")
</pallas_src>

<mosaic_0001>
module attributes {stable_mosaic.version = 11 : i64} {
  func.func @_mlp_kernel(%arg0: i32, %arg1: i32, %arg2: memref<16x32xf32, #tpu.memory_space<vmem>>, %arg3: memref<32x128xf32, #tpu.memory_space<vmem>>, %arg4: memref<1x128xf32, #tpu.memory_space<vmem>>, %arg5: memref<128x128xf32, #tpu.memory_space<vmem>>, %arg6: memref<1x128xf32, #tpu.memory_space<vmem>>, %arg7: memref<16x128xf32, #tpu.memory_space<vmem>>, %arg8: memref<16x128xf32, #tpu.memory_space<vmem>>) attributes {dimension_semantics = [#tpu.dimension_semantics<parallel>, #tpu.dimension_semantics<arbitrary>], iteration_bounds = array<i64: 1, 1>, scalar_prefetch = 0 : i64, scratch_operands = 1 : i64, tpu.core_type = #tpu.core_type<tc>, window_params = [{transform_indices = @transform_0, window_bounds = array<i64: 16, 32>}, {pipeline_mode = #tpu.pipeline_mode<synchronous>, transform_indices = @transform_1, window_bounds = array<i64: 32, 128>}, {pipeline_mode = #tpu.pipeline_mode<synchronous>, transform_indices = @transform_2, window_bounds = array<i64: 1, 128>}, {pipeline_mode = #tpu.pipeline_mode<synchronous>, transform_indices = @transform_3, window_bounds = array<i64: 128, 128>}, {pipeline_mode = #tpu.pipeline_mode<synchronous>, transform_indices = @transform_4, window_bounds = array<i64: 1, 128>}, {transform_indices = @transform_5, window_bounds = array<i64: 16, 128>}]} {
    %c0_i32 = arith.constant 0 : i32
    %0 = arith.cmpi eq, %arg1, %c0_i32 : i32
    %1 = arith.extui %0 : i1 to i32
    %c0_i32_0 = arith.constant 0 : i32
    %2 = arith.cmpi ne, %1, %c0_i32_0 : i32
    scf.if %2 {
      %cst_18 = arith.constant 0.000000e+00 : f32
      %25 = vector.broadcast %cst_18 : f32 to vector<16x128xf32>
      %c0_19 = arith.constant 0 : index
      %c0_20 = arith.constant 0 : index
      %26 = vector.load %arg8[%c0_19, %c0_20] : memref<16x128xf32, #tpu.memory_space<vmem>>, vector<16x128xf32>
      tpu.vector_store %arg8[%c0_19, %c0_20], %25 {strides = array<i32>} : memref<16x128xf32, #tpu.memory_space<vmem>>, vector<16x128xf32>,
    } else {
    }
    %c0 = arith.constant 0 : index
    %c0_1 = arith.constant 0 : index
    %3 = vector.load %arg2[%c0, %c0_1] : memref<16x32xf32, #tpu.memory_space<vmem>>, vector<16x32xf32>
    %c0_2 = arith.constant 0 : index
    %c0_3 = arith.constant 0 : index
    %4 = vector.load %arg3[%c0_2, %c0_3] : memref<32x128xf32, #tpu.memory_space<vmem>>, vector<32x128xf32>
    %cst = arith.constant dense<0.000000e+00> : vector<16x128xf32>
    %5 = tpu.matmul %3, %4, %cst {dimension_numbers = #tpu.dot_dimension_numbers<[1], [0], [0], [1], [0, 0, 1, 1], [], []>} : vector<16x32xf32>, vector<32x128xf32>, vector<16x128xf32> -> vector<16x128xf32>
    %c0_4 = arith.constant 0 : index
    %c0_5 = arith.constant 0 : index
    %6 = vector.load %arg4[%c0_4, %c0_5] : memref<1x128xf32, #tpu.memory_space<vmem>>, vector<1x128xf32>
    %7 = vector.broadcast %6 : vector<1x128xf32> to vector<16x128xf32>
    %8 = arith.addf %5, %7 : vector<16x128xf32>
    %cst_6 = arith.constant 5.000000e-01 : f32
    %9 = vector.broadcast %cst_6 : f32 to vector<16x128xf32>
    %10 = arith.mulf %9, %8 : vector<16x128xf32>
    %cst_7 = arith.constant 0.707106769 : f32
    %11 = vector.broadcast %cst_7 : f32 to vector<16x128xf32>
    %12 = arith.mulf %8, %11 : vector<16x128xf32>
    %13 = math.erf %12 : vector<16x128xf32>
    %cst_8 = arith.constant 1.000000e+00 : f32
    %14 = vector.broadcast %cst_8 : f32 to vector<16x128xf32>
    %15 = arith.addf %14, %13 : vector<16x128xf32>
    %16 = arith.mulf %10, %15 : vector<16x128xf32>
    %c0_9 = arith.constant 0 : index
    %c0_10 = arith.constant 0 : index
    %17 = vector.load %arg8[%c0_9, %c0_10] : memref<16x128xf32, #tpu.memory_space<vmem>>, vector<16x128xf32>
    %c0_11 = arith.constant 0 : index
    %c0_12 = arith.constant 0 : index
    %18 = vector.load %arg5[%c0_11, %c0_12] : memref<128x128xf32, #tpu.memory_space<vmem>>, vector<128x128xf32>
    %cst_13 = arith.constant dense<0.000000e+00> : vector<16x128xf32>
    %19 = tpu.matmul %16, %18, %cst_13 {dimension_numbers = #tpu.dot_dimension_numbers<[1], [0], [0], [1], [0, 0, 1, 1], [], []>} : vector<16x128xf32>, vector<128x128xf32>, vector<16x128xf32> -> vector<16x128xf32>
    %20 = arith.addf %17, %19 : vector<16x128xf32>
    %c0_14 = arith.constant 0 : index
    %c0_15 = arith.constant 0 : index
    %21 = vector.load %arg8[%c0_14, %c0_15] : memref<16x128xf32, #tpu.memory_space<vmem>>, vector<16x128xf32>
    tpu.vector_store %arg8[%c0_14, %c0_15], %20 {strides = array<i32>} : memref<16x128xf32, #tpu.memory_space<vmem>>, vector<16x128xf32>,
    %c0_i32_16 = arith.constant 0 : i32
    %22 = arith.cmpi eq, %arg1, %c0_i32_16 : i32
    %23 = arith.extui %22 : i1 to i32
    %c0_i32_17 = arith.constant 0 : i32
    %24 = arith.cmpi ne, %23, %c0_i32_17 : i32
    scf.if %24 {
      %c0_18 = arith.constant 0 : index
      %c0_19 = arith.constant 0 : index
      %25 = vector.load %arg8[%c0_18, %c0_19] : memref<16x128xf32, #tpu.memory_space<vmem>>, vector<16x128xf32>
      %c0_20 = arith.constant 0 : index
      %c0_21 = arith.constant 0 : index
      %26 = vector.load %arg6[%c0_20, %c0_21] : memref<1x128xf32, #tpu.memory_space<vmem>>, vector<1x128xf32>
      %27 = vector.broadcast %26 : vector<1x128xf32> to vector<16x128xf32>
      %28 = arith.addf %25, %27 : vector<16x128xf32>
      %c0_22 = arith.constant 0 : index
      %c0_23 = arith.constant 0 : index
      %29 = vector.load %arg7[%c0_22, %c0_23] : memref<16x128xf32, #tpu.memory_space<vmem>>, vector<16x128xf32>
      tpu.vector_store %arg7[%c0_22, %c0_23], %28 {strides = array<i32>} : memref<16x128xf32, #tpu.memory_space<vmem>>, vector<16x128xf32>,
    } else {
    }
    return
  }
  func.func @transform_0(%arg0: i32, %arg1: i32) -> (i32, i32) {
    %c0_i32 = arith.constant 0 : i32
    %c0_i32_0 = arith.constant 0 : i32
    return %arg0, %c0_i32 : i32, i32
  }
  func.func @transform_1(%arg0: i32, %arg1: i32) -> (i32, i32) {
    %c0_i32 = arith.constant 0 : i32
    %c0_i32_0 = arith.constant 0 : i32
    return %c0_i32, %arg1 : i32, i32
  }
  func.func @transform_2(%arg0: i32, %arg1: i32) -> (i32, i32) {
    %c0_i32 = arith.constant 0 : i32
    %c0_i32_0 = arith.constant 0 : i32
    return %c0_i32, %arg1 : i32, i32
  }
  func.func @transform_3(%arg0: i32, %arg1: i32) -> (i32, i32) {
    %c0_i32 = arith.constant 0 : i32
    %c0_i32_0 = arith.constant 0 : i32
    return %arg1, %c0_i32 : i32, i32
  }
  func.func @transform_4(%arg0: i32, %arg1: i32) -> (i32, i32) {
    %c0_i32 = arith.constant 0 : i32
    %c0_i32_0 = arith.constant 0 : i32
    %c0_i32_1 = arith.constant 0 : i32
    return %c0_i32, %c0_i32_0 : i32, i32
  }
  func.func @transform_5(%arg0: i32, %arg1: i32) -> (i32, i32) {
    %c0_i32 = arith.constant 0 : i32
    %c0_i32_0 = arith.constant 0 : i32
    return %arg0, %c0_i32 : i32, i32
  }
}

</mosaic_0001>

<llo_original>
// kernel: mlp_pallas_prepared.1
$region0: #{mlp_pallas_prepared.1}
  #allocation0 [shape = 'u32[]', space=smem, size = 0x4, offset = 0x4, fixed_abs, tag = 'smem constant byte address 0x4 - core index']
  #allocation1 [shape = 'u32[72,128]{1,0:T(1,128)}', space=vmem, size = 0x9000, scoped, tag = 'internal scratch']
  #allocation2 [shape = 'f32[16,128]{1,0:T(8,128)}', space=vmem, size = 0x2000, scoped, tag = 'scratch operand']
  %s0 = inlined_call_operand.hbm [shape: f32[16,32], index: 0, kind: input, shape index: {}]
  %s1 = inlined_call_operand.hbm [shape: f32[32,128], index: 1, kind: input, shape index: {}]
  %s2 = inlined_call_operand.vmem [shape: f32[1,128], index: 2, kind: input, shape index: {}]
  %s3 = inlined_call_operand.hbm [shape: f32[128,128], index: 3, kind: input, shape index: {}]
  %s4 = inlined_call_operand.vmem [shape: f32[1,128], index: 4, kind: input, shape index: {}]
  %s5 = inlined_call_operand.vmem [shape: f32[16,128], index: 5, kind: output, shape index: {}]
  %s6 = sld [smem:[#allocation0]]
  $region50: #{mlp_pallas_prepared.1} parent=0
    _
  %s8 = ssub.s32 1, %s6
  %s9 = scalar_select 0, %s8, %s6
  $region1: #{mlp_pallas_prepared.1} parent=0
    #allocation3 [shape = 'u8[8192]{0}', space=vmem, size = 0x2000, scoped, tag = 'input window, operand 0, single buffered']
    #allocation4 [shape = 's32[1]{0}', space=sflag, size = 0x4, scoped, tag = 'scoped memory for mlp_pallas_prepared.1']
    #allocation5 [shape = 'u8[16384]{0}', space=vmem, size = 0x4000, scoped, tag = 'input window, operand 1, single buffered']
    #allocation6 [shape = 's32[1]{0}', space=sflag, size = 0x4, scoped, tag = 'scoped memory for mlp_pallas_prepared.1']
    #allocation7 [shape = 'u8[65536]{0}', space=vmem, size = 0x10000, scoped, tag = 'input window, operand 3, single buffered']
    %10 = vsyncpa [#allocation4], 0
    %11 = vsyncpa [#allocation6], 0
    // Predicated region
    $region2: #{mlp_pallas_prepared.1} parent=1 // pred_check
      _
    $region3: #{mlp_pallas_prepared.1} parent=1 // pred_check_branch
      %13 = sbr.rel (0) target = $region5
    $region4: #{mlp_pallas_prepared.1} parent=1 // pred_region
      %15 = vsyncadd [#allocation4], 0
      %s16 = sshll.u32 %s0, 4
      %s17 = int_to_ptr.hbm [resolvable:$true] %s16
      %s18 = sshll.u32 [#allocation3], 4
      %s19 = int_to_ptr.vmem [resolvable:$true] %s18
      %24 = dma.hbm_to_vmem [thread:$0]  %s17, 256, %s19, [#allocation4], 128, 128, 8
    $region5: #{mlp_pallas_prepared.1} parent=1 // pred_fallthru
      _
    // Predicated region
    $region6: #{mlp_pallas_prepared.1} parent=1 // pred_check
      _
    $region7: #{mlp_pallas_prepared.1} parent=1 // pred_check_branch
      %26 = sbr.rel (0) target = $region9
    $region8: #{mlp_pallas_prepared.1} parent=1 // pred_region
      %28 = vsyncadd [#allocation6], 0
      %s29 = sshll.u32 %s1, 4
      %s30 = int_to_ptr.hbm [resolvable:$true] %s29
      %s31 = sshll.u32 [#allocation5], 4
      %s32 = int_to_ptr.vmem [resolvable:$true] %s31
      %37 = dma.hbm_to_vmem [thread:$0]  %s30, 512, %s32, [#allocation6], 128, 128, 8
    $region9: #{mlp_pallas_prepared.1} parent=1 // pred_fallthru
      _
    // Predicated region
    $region10: #{mlp_pallas_prepared.1} parent=1 // pred_check
      _
    $region11: #{mlp_pallas_prepared.1} parent=1 // pred_check_branch
      %39 = sbr.rel (0) target = $region13
    $region12: #{mlp_pallas_prepared.1} parent=1 // pred_region
      _
    $region13: #{mlp_pallas_prepared.1} parent=1 // pred_fallthru
      _
    // Predicated region
    $region14: #{mlp_pallas_prepared.1} parent=1 // pred_check
      _
    $region15: #{mlp_pallas_prepared.1} parent=1 // pred_check_branch
      %41 = sbr.rel (0) target = $region17
    $region16: #{mlp_pallas_prepared.1} parent=1 // pred_region
      %43 = vsyncadd [#allocation6], 0
      %s44 = sshll.u32 %s3, 4
      %s45 = int_to_ptr.hbm [resolvable:$true] %s44
      %s46 = sshll.u32 [#allocation7], 4
      %s47 = int_to_ptr.vmem [resolvable:$true] %s46
      %52 = dma.hbm_to_vmem [thread:$0]  %s45, 2048, %s47, [#allocation6], 128, 128, 8
    $region17: #{mlp_pallas_prepared.1} parent=1 // pred_fallthru
      _
    // Predicated region
    $region18: #{mlp_pallas_prepared.1} parent=1 // pred_check
      _
    $region19: #{mlp_pallas_prepared.1} parent=1 // pred_check_branch
      %54 = sbr.rel (0) target = $region21
    $region20: #{mlp_pallas_prepared.1} parent=1 // pred_region
      _
    $region21: #{mlp_pallas_prepared.1} parent=1 // pred_fallthru
      _
    // Predicated region
    $region22: #{mlp_pallas_prepared.1} parent=1 // pred_check
      _
    $region23: #{mlp_pallas_prepared.1} parent=1 // pred_check_branch
      %56 = sbr.rel (0) target = $region25
    $region24: #{mlp_pallas_prepared.1} parent=1 // pred_region
      %58 = dma.done [#allocation4], 256
    $region25: #{mlp_pallas_prepared.1} parent=1 // pred_fallthru
      _
    // Predicated region
    $region26: #{mlp_pallas_prepared.1} parent=1 // pred_check
      _
    $region27: #{mlp_pallas_prepared.1} parent=1 // pred_check_branch
      %60 = sbr.rel (0) target = $region29
    $region28: #{mlp_pallas_prepared.1} parent=1 // pred_region
      %62 = dma.done [#allocation6], 512
    $region29: #{mlp_pallas_prepared.1} parent=1 // pred_fallthru
      _
    // Predicated region
    $region30: #{mlp_pallas_prepared.1} parent=1 // pred_check
      _
    $region31: #{mlp_pallas_prepared.1} parent=1 // pred_check_branch
      %64 = sbr.rel (0) target = $region33
    $region32: #{mlp_pallas_prepared.1} parent=1 // pred_region
      %66 = dma.done [#allocation6], 2048
    $region33: #{mlp_pallas_prepared.1} parent=1 // pred_fallthru
      _
    %p67 = scmp.eq.s32.totalorder 0, 0
    // Predicated region
    $region34: #{mlp_pallas_prepared.1} parent=1 // pred_check
      %p68 = pneg %p67
    $region35: #{mlp_pallas_prepared.1} parent=1 // pred_check_branch
      %70 = sbr.rel (%p68) target = $region37
    $region36: #{mlp_pallas_prepared.1} parent=1 // pred_region
      %71 = vst [vmem:[#allocation2] sm:$0xff] 0.0
      %72 = vst [vmem:[#allocation2 + $0x8] sm:$0xff] 0.0
    $region37: #{mlp_pallas_prepared.1} parent=1 // pred_fallthru
      _
    %v73 = vld [vmem:[#allocation3] sm:$0xff]
    %v74 = vld [vmem:[#allocation3 + $0x8] sm:$0xff]
    %v75 = vld [vmem:[#allocation5] sm:$0xff]
    %v76 = vld [vmem:[#allocation5 + $0x8] sm:$0xff]
    %v77 = vld [vmem:[#allocation5 + $0x10] sm:$0xff]
    %v78 = vld [vmem:[#allocation5 + $0x18] sm:$0xff]
    %v79 = vld [vmem:[%s2] sm:$0x1]
    %v81 = vperm.slane %v79, 0
    %vm83 = vcmask 261120
    %v85 = vsel %vm83, %v73, 0
    %v88 = vsel %vm83, %v74, 0
    %90 = vmatpush.msra.mxu0 0.0
    %91 = vmatpush.msra.mxu0 0.0
    %92 = vmatpush.msra.mxu0 0.0
    %93 = vmatpush.msra.mxu0 0.0
    %94 = vmatpush.msra.mxu0 0.0
    %95 = vmatpush.msra.mxu0 0.0
    %96 = vmatpush.msra.mxu0 0.0
    %97 = vmatpush.msra.mxu0 0.0
    %98 = vmatpush.msra.mxu0 0.0
    %99 = vmatpush.msra.mxu0 0.0
    %100 = vmatpush.msra.mxu0 0.0
    %101 = vmatpush.msra.mxu0 0.0
    %102 = vmatpush.msra.mxu0 %v78
    %103 = vmatpush.msra.mxu0 %v77
    %104 = vmatpush.msra.mxu0 %v76
    %105 = vmatpush.msra.mxu0 %v75
    %106 = vmatmul.f32.gmra.mxu0 %v85
    %v107 = vpop.f32.mrf.mxu0
    %v108 = vadd.f32 %v81, %v107
    %109 = vmatmul.f32.gmra.mxu0 %v88
    %v110 = vpop.f32.mrf.mxu0
    %v111 = vadd.f32 %v81, %v110
    %112 = vdwg.mxu0
    %v113 = vmul.f32 %v108, 0.5
    %v114 = vmul.f32 %v111, 0.5
    %v115 = vmul.f32 %v108, 0.70710677
    %v116 = vmul.f32 %v111, 0.70710677
    %v117 = vmul.f32 %v115, %v115
    %v118 = vmin.f32 16.0, %v117
    %v119 = vmul.f32 %v118, 2.1237322e-06
    %v120 = vadd.f32 %v119, 0.00028619796
    %v121 = vmul.f32 %v118, %v120
    %v122 = vadd.f32 %v121, 0.0036580483
    %v123 = vmul.f32 %v118, %v122
    %v124 = vadd.f32 %v123, 0.05243302
    %v125 = vmul.f32 %v118, %v124
    %v126 = vadd.f32 %v125, 0.18741608
    %v127 = vmul.f32 %v118, %v126
    %v128 = vadd.f32 %v127, 1.1283791
    %v129 = vmul.f32 %v115, %v128
    %v130 = vmul.f32 %v118, 3.8918573e-05
    %v131 = vadd.f32 %v130, 0.001143296
    %v132 = vmul.f32 %v118, %v131
    %v133 = vadd.f32 %v132, 0.014752088
    %v134 = vmul.f32 %v118, %v133
    %v135 = vadd.f32 %v134, 0.112945676
    %v136 = vmul.f32 %v118, %v135
    %v137 = vadd.f32 %v136, 0.4994258
    %v138 = vmul.f32 %v118, %v137
    %v139 = vadd.f32 %v138, 1.0
    %v140 = vrcp.pop %v139
    %v141 = vmul.f32 %v139, %v140
    %v142 = vsub.f32 1.0, %v141
    %v143 = vmul.f32 %v140, %v142
    %v144 = vadd.f32 %v140, %v143
    %vm145 = vweird.f32 %v139
    %vm146 = vweird.f32 %v140
    %vm147 = vmor %vm145, %vm146
    %v148 = vsel %vm147, %v140, %v144
    %v149 = vand.u32 2147483647, %v139
    %vm150 = vcmp.eq.f32.partialorder %v149, 8.507059e+37
    %v151 = vand.u32 %v139, 2147483648
    %v152 = vor.u32 1.1754944e-38, %v151
    %v153 = vsel %vm150, %v152, %v148
    %v154 = vmul.f32 %v129, %v153
    %v155 = vmin.f32 %v154, 1.0
    %v156 = vmax.f32 %v155, -1.0
    %v157 = vmul.f32 %v116, %v116
    %v158 = vmin.f32 16.0, %v157
    %v159 = vmul.f32 %v158, 2.1237322e-06
    %v160 = vadd.f32 %v159, 0.00028619796
    %v161 = vmul.f32 %v158, %v160
    %v162 = vadd.f32 %v161, 0.0036580483
    %v163 = vmul.f32 %v158, %v162
    %v164 = vadd.f32 %v163, 0.05243302
    %v165 = vmul.f32 %v158, %v164
    %v166 = vadd.f32 %v165, 0.18741608
    %v167 = vmul.f32 %v158, %v166
    %v168 = vadd.f32 %v167, 1.1283791
    %v169 = vmul.f32 %v116, %v168
    %v170 = vmul.f32 %v158, 3.8918573e-05
    %v171 = vadd.f32 %v170, 0.001143296
    %v172 = vmul.f32 %v158, %v171
    %v173 = vadd.f32 %v172, 0.014752088
    %v174 = vmul.f32 %v158, %v173
    %v175 = vadd.f32 %v174, 0.112945676
    %v176 = vmul.f32 %v158, %v175
    %v177 = vadd.f32 %v176, 0.4994258
    %v178 = vmul.f32 %v158, %v177
    %v179 = vadd.f32 %v178, 1.0
    %v180 = vrcp.pop %v179
    %v181 = vmul.f32 %v179, %v180
    %v182 = vsub.f32 1.0, %v181
    %v183 = vmul.f32 %v180, %v182
    %v184 = vadd.f32 %v180, %v183
    %vm185 = vweird.f32 %v179
    %vm186 = vweird.f32 %v180
    %vm187 = vmor %vm185, %vm186
    %v188 = vsel %vm187, %v180, %v184
    %v189 = vand.u32 2147483647, %v179
    %vm190 = vcmp.eq.f32.partialorder %v189, 8.507059e+37
    %v191 = vand.u32 %v179, 2147483648
    %v192 = vor.u32 1.1754944e-38, %v191
    %v193 = vsel %vm190, %v192, %v188
    %v194 = vmul.f32 %v169, %v193
    %v195 = vmin.f32 %v194, 1.0
    %v196 = vmax.f32 %v195, -1.0
    %v197 = vadd.f32 %v156, 1.0
    %v198 = vadd.f32 %v196, 1.0
    %v199 = vmul.f32 %v113, %v197
    %v200 = vmul.f32 %v114, %v198
    %v201 = vld [vmem:[#allocation2] sm:$0xff]
    %v202 = vld [vmem:[#allocation2 + $0x8] sm:$0xff]
    %v203 = vld [vmem:[#allocation7] sm:$0xff]
    %v204 = vld [vmem:[#allocation7 + $0x8] sm:$0xff]
    %v205 = vld [vmem:[#allocation7 + $0x10] sm:$0xff]
    %v206 = vld [vmem:[#allocation7 + $0x18] sm:$0xff]
    %v207 = vld [vmem:[#allocation7 + $0x20] sm:$0xff]
    %v208 = vld [vmem:[#allocation7 + $0x28] sm:$0xff]
    %v209 = vld [vmem:[#allocation7 + $0x30] sm:$0xff]
    %v210 = vld [vmem:[#allocation7 + $0x38] sm:$0xff]
    %v211 = vld [vmem:[#allocation7 + $0x40] sm:$0xff]
    %v212 = vld [vmem:[#allocation7 + $0x48] sm:$0xff]
    %v213 = vld [vmem:[#allocation7 + $0x50] sm:$0xff]
    %v214 = vld [vmem:[#allocation7 + $0x58] sm:$0xff]
    %v215 = vld [vmem:[#allocation7 + $0x60] sm:$0xff]
    %v216 = vld [vmem:[#allocation7 + $0x68] sm:$0xff]
    %v217 = vld [vmem:[#allocation7 + $0x70] sm:$0xff]
    %v218 = vld [vmem:[#allocation7 + $0x78] sm:$0xff]
    %219 = vmatpush.msra.mxu0 %v218
    %220 = vmatpush.msra.mxu0 %v217
    %221 = vmatpush.msra.mxu0 %v216
    %222 = vmatpush.msra.mxu0 %v215
    %223 = vmatpush.msra.mxu0 %v214
    %224 = vmatpush.msra.mxu0 %v213
    %225 = vmatpush.msra.mxu0 %v212
    %226 = vmatpush.msra.mxu0 %v211
    %227 = vmatpush.msra.mxu0 %v210
    %228 = vmatpush.msra.mxu0 %v209
    %229 = vmatpush.msra.mxu0 %v208
    %230 = vmatpush.msra.mxu0 %v207
    %231 = vmatpush.msra.mxu0 %v206
    %232 = vmatpush.msra.mxu0 %v205
    %233 = vmatpush.msra.mxu0 %v204
    %234 = vmatpush.msra.mxu0 %v203
    %235 = vmatmul.f32.gmra.mxu0 %v199
    %v236 = vpop.f32.mrf.mxu0
    %v237 = vadd.f32 0.0, %v236
    %238 = vmatmul.f32.gmra.mxu0 %v200
    %v239 = vpop.f32.mrf.mxu0
    %v240 = vadd.f32 0.0, %v239
    %241 = vdwg.mxu0
    %v242 = vadd.f32 %v201, %v237
    %v243 = vadd.f32 %v202, %v240
    %244 = vst [vmem:[#allocation2] sm:$0xff] %v242
    %245 = vst [vmem:[#allocation2 + $0x8] sm:$0xff] %v243
    // Predicated region
    $region38: #{mlp_pallas_prepared.1} parent=1 // pred_check
      %p246 = pneg %p67
    $region39: #{mlp_pallas_prepared.1} parent=1 // pred_check_branch
      %248 = sbr.rel (%p246) target = $region41
    $region40: #{mlp_pallas_prepared.1} parent=1 // pred_region
      %v249 = vld [vmem:[#allocation2] sm:$0xff]
      %v250 = vld [vmem:[#allocation2 + $0x8] sm:$0xff]
      %v251 = vld [vmem:[%s4] sm:$0x1]
      %v253 = vperm.slane %v251, 0
      %v255 = vadd.f32 %v249, %v253
      %v256 = vadd.f32 %v250, %v253
      %257 = vst [vmem:[%s5] sm:$0xff] %v255
      %258 = vst [vmem:[%s5 + $0x8] sm:$0xff] %v256
    $region41: #{mlp_pallas_prepared.1} parent=1 // pred_fallthru
      _
    // Predicated region
    $region42: #{mlp_pallas_prepared.1} parent=1 // pred_check
      _
    $region43: #{mlp_pallas_prepared.1} parent=1 // pred_check_branch
      %260 = sbr.rel (0) target = $region45
    $region44: #{mlp_pallas_prepared.1} parent=1 // pred_region
      _
    $region45: #{mlp_pallas_prepared.1} parent=1 // pred_fallthru
      _
    // Predicated region
    $region46: #{mlp_pallas_prepared.1} parent=1 // pred_check
      _
    $region47: #{mlp_pallas_prepared.1} parent=1 // pred_check_branch
      %262 = sbr.rel (0) target = $region49
    $region48: #{mlp_pallas_prepared.1} parent=1 // pred_region
      _
    $region49: #{mlp_pallas_prepared.1} parent=1 // pred_fallthru
      _
    %263 = vsyncpa [#allocation4], 1
    %264 = vsyncpa [#allocation6], 1

</llo_original>
